<compile_context>
chip_gen: v7x
topology: tpu7x:2x2x1
jax: 0.10.0
libtpu: 0.0.40
codegen_flags: <defaults>
</compile_context>

<pallas_src>
import jax
import jax.numpy as jnp
from jax.experimental import pallas as pl
from jax.experimental.pallas import tpu as pltpu

NUM_G = 5                      # gp_layers_Gm
NUM_Z = 4                      # gp_layers_Zm
L1 = NUM_G + NUM_Z             # 9 stage-1 GP layers
NUM_FEAT = NUM_G + NUM_Z + NUM_G   # 14 features into the output GP
L1P = 16                       # stage-1 layer count padded (lane friendly)
FPAD = 16                      # feature count padded to 16

_FULL_LOAD = 2500.0 * 10.0 ** 3
_P1 = 2.314 * 10.0 ** (-6)
_P2 = -3.295 * 10.0 ** (-4)
_P3 = -3.99 * 10.0 ** (-3)
_P4 = 2.537
_P5 = 19.21


def _polynomial(x):
    # polynomial_function() in Horner form (same coefficients, no ones_like).
    xs = x * (100.0 / _FULL_LOAD)
    return (((_P1 * xs + _P2) * xs + _P3) * xs + _P4) * xs + _P5


def bayesian_nn_kernel(x_ref, xtr_rep_ref, gamma_ref, abd_ref, consts_ref,
                       xtr_out_ref, bsq_ref, alpha_out_ref, out_sc_ref,
                       o_ref):
    # x_ref        : (1, TN)       test points, lane-major
    # xtr_rep_ref  : (M*L1P, 1)    train_x tiled once per (padded) layer
    # gamma_ref    : (M*L1P, 1)    -0.5/ls_l^2 per train point (0 for padding)
    # abd_ref      : (L1P, M*L1P)  block-diagonal (outputscale*alpha) matrix
    # consts_ref   : (L1P, 1)      constant means (0 for padding)
    # xtr_out_ref  : (M, FPAD)     output-GP training inputs (zero-padded)
    # bsq_ref      : (M, 1)        precomputed ||xtr_out||^2 rows
    # alpha_out_ref: (M, 1)        outputscale-scaled output-GP alpha
    # out_sc_ref   : (2,) SMEM     [gamma_out, const_out]
    # o_ref        : (1, TN)
    x = x_ref[...]                                   # (1, TN)

    # --- stage 1: all 9 GP-layer means via one exp + one block-diag matmul ---
    diff = xtr_rep_ref[...] - x                      # (M*L1P, TN)
    arg = (diff * diff) * gamma_ref[...]             # (M*L1P, TN)
    k1 = jnp.exp(arg)                                # single lane-dense exp
    means = jnp.dot(abd_ref[...], k1,
                    preferred_element_type=jnp.float32) + consts_ref[...]
    # means: (L1P, TN); rows 0..4 = Gm, rows 5..8 = Zm, rows 9..15 = 0

    # --- polynomial feature + feature stacking (features along sublanes) ---
    f = _polynomial(means[:NUM_G, :])                # (NUM_G, TN)
    pad = jnp.zeros((FPAD - NUM_FEAT, x.shape[1]), jnp.float32)
    all_out = jnp.concatenate([means[:L1, :], f, pad], axis=0)   # (FPAD, TN)

    # --- output GP posterior mean ---
    cross = jnp.dot(xtr_out_ref[...], all_out,
                    preferred_element_type=jnp.float32)          # (M, TN)
    a_sq = jnp.sum(all_out * all_out, axis=0, keepdims=True)     # (1, TN)
    sq2 = jnp.maximum(bsq_ref[...] + a_sq - 2.0 * cross, 0.0)    # (M, TN)
    gamma_o = out_sc_ref[0]
    c_o = out_sc_ref[1]
    k2 = jnp.exp(sq2 * gamma_o)                                  # (M, TN)
    mean = jnp.sum(alpha_out_ref[...] * k2, axis=0, keepdims=True) + c_o
    o_ref[...] = mean.astype(o_ref.dtype)                        # (1, TN)


def bayesian_nn_forward(x, xtr, alphas, consts, ls, outscales,
                        xtr_out, alpha_out, out_params, *, tile_n=256):
    N = x.shape[0]
    M = xtr.shape[0]
    tile_n = min(tile_n, max(128, N))
    MP = M * L1P

    # ---- pad N up to a multiple of tile_n so any batch size runs cleanly ----
    n_pad = (-N) % tile_n
    x_row = x.reshape(1, N)
    if n_pad:
        x_row = jnp.concatenate(
            [x_row, jnp.zeros((1, n_pad), x_row.dtype)], axis=1)
    NP = N + n_pad
    grid_n = NP // tile_n

    # ---- pre-fold stage-1 GP parameters (tiny host-side arrays) ----
    gamma = -0.5 / (ls * ls)                                     # (1, L1)
    gamma_pad = jnp.concatenate(
        [gamma, jnp.zeros((1, L1P - L1), jnp.float32)], axis=1)  # (1, L1P)
    gamma_col = jnp.repeat(gamma_pad.reshape(L1P), M).reshape(MP, 1)
    xtr_rep = jnp.tile(xtr.reshape(M), L1P).reshape(MP, 1)

    alphas_scaled = alphas * outscales                           # (M, L1)
    abd = jnp.zeros((L1P, MP), jnp.float32)
    for l in range(L1):
        abd = abd.at[l, l * M:(l + 1) * M].set(alphas_scaled[:, l])

    consts_col = jnp.concatenate(
        [consts.reshape(L1, 1), jnp.zeros((L1P - L1, 1), jnp.float32)], axis=0)

    # ---- pre-fold output-GP parameters / hoist grid-invariant reductions ----
    xtr_out_pad = jnp.concatenate(
        [xtr_out, jnp.zeros((M, FPAD - NUM_FEAT), jnp.float32)], axis=1)
    b_sq = jnp.sum(xtr_out * xtr_out, axis=1, keepdims=True)     # (M, 1)
    ls_o = out_params[0, 0]
    os_o = out_params[0, 1]
    c_o = out_params[0, 2]
    alpha_out_scaled = (alpha_out * os_o).astype(jnp.float32)    # (M, 1)
    out_scalars = jnp.stack([-0.5 / (ls_o * ls_o), c_o]).astype(jnp.float32)

    cost = pl.CostEstimate(
        flops=int(NP * (3 * MP + 2 * MP * L1P + L1P + 9 * NUM_G
                        + 2 * FPAD * M + 2 * FPAD + 7 * M)),
        transcendentals=int(NP * (MP + M)),
        bytes_accessed=int(4 * (2 * NP + grid_n * (2 * MP + L1P * MP + L1P
                                                   + M * FPAD + 2 * M + 2))),
    )

    out_row = pl.pallas_call(
        bayesian_nn_kernel,
        out_shape=jax.ShapeDtypeStruct((1, NP), jnp.float32),
        grid_spec=pltpu.PrefetchScalarGridSpec(
            num_scalar_prefetch=0,
            grid=(grid_n,),
            in_specs=[
                pl.BlockSpec((1, tile_n), lambda i: (0, i)),    # x (lane major)
                pl.BlockSpec((MP, 1), lambda i: (0, 0)),        # tiled train_x
                pl.BlockSpec((MP, 1), lambda i: (0, 0)),        # folded gammas
                pl.BlockSpec((L1P, MP), lambda i: (0, 0)),      # block-diag alpha
                pl.BlockSpec((L1P, 1), lambda i: (0, 0)),       # constant means
                pl.BlockSpec((M, FPAD), lambda i: (0, 0)),      # output-GP train
                pl.BlockSpec((M, 1), lambda i: (0, 0)),         # ||xtr_out||^2
                pl.BlockSpec((M, 1), lambda i: (0, 0)),         # scaled out alpha
                pl.BlockSpec(memory_space=pltpu.MemorySpace.SMEM),  # [g_o, c_o]
            ],
            out_specs=pl.BlockSpec((1, tile_n), lambda i: (0, i)),
        ),
        compiler_params=pltpu.CompilerParams(
            dimension_semantics=("parallel",)),
        cost_estimate=cost,
    )(x_row, xtr_rep, gamma_col, abd, consts_col, xtr_out_pad, b_sq,
      alpha_out_scaled, out_scalars)

    return out_row[:, :N].reshape(N, 1)


def bayesian_nn_reference(x, xtr, alphas, consts, ls, outscales,
                          xtr_out, alpha_out, out_params):
    # pure-JAX reference mirroring the PyTorch forward semantics
    sqdist1 = (x - xtr.reshape(1, -1)) ** 2                       # (N, M)
    cols = []
    for l in range(L1):
        k_l = outscales[0, l] * jnp.exp(-0.5 * sqdist1 / ls[0, l] ** 2)
        cols.append(k_l @ alphas[:, l:l + 1] + consts[0, l])
    g = jnp.concatenate(cols[:NUM_G], axis=-1)
    z = jnp.concatenate(cols[NUM_G:], axis=-1)
    f = _polynomial(g)
    all_out = jnp.concatenate([g, z, f], axis=-1)                 # (N, 14)
    sq2 = (jnp.sum(all_out ** 2, -1, keepdims=True)
           + jnp.sum(xtr_out ** 2, -1)[None, :]
           - 2.0 * all_out @ xtr_out.T)
    sq2 = jnp.maximum(sq2, 0.0)
    k2 = out_params[0, 1] * jnp.exp(-0.5 * sq2 / out_params[0, 0] ** 2)
    return k2 @ alpha_out + out_params[0, 2]


if __name__ == "__main__":
    N, M = 512, 16  # test points, GP training points
    key = jax.random.PRNGKey(0)
    ks = jax.random.split(key, 8)

    x = jax.random.normal(ks[0], (N, 1), jnp.float32)
    xtr = jax.random.normal(ks[1], (M, 1), jnp.float32)
    alphas = 0.1 * jax.random.normal(ks[2], (M, L1), jnp.float32)
    consts = jax.random.normal(ks[3], (1, L1), jnp.float32)
    ls = jnp.abs(jax.random.normal(ks[4], (1, L1), jnp.float32)) + 0.5
    outscales = jnp.abs(jax.random.normal(ks[5], (1, L1), jnp.float32)) + 0.5
    xtr_out = jax.random.normal(ks[6], (M, NUM_FEAT), jnp.float32)
    alpha_out = 0.1 * jax.random.normal(ks[7], (M, 1), jnp.float32)
    # [lengthscale, outputscale, constant_mean, pad] of the output GP layer.
    # Lengthscale sized so the output-GP kernel values are non-trivial.
    out_params = jnp.array([[20.0, 0.8, 0.25, 0.0]], jnp.float32)

    out = bayesian_nn_forward(x, xtr, alphas, consts, ls, outscales,
                              xtr_out, alpha_out, out_params, tile_n=256)
    out = jax.block_until_ready(out)

    ref = bayesian_nn_reference(x, xtr, alphas, consts, ls, outscales,
                                xtr_out, alpha_out, out_params)
    assert out.shape == (N, 1)
    assert jnp.allclose(out, ref, rtol=2e-3, atol=2e-3), (
        float(jnp.max(jnp.abs(out - ref))))
    print("KERNEL_OK")
</pallas_src>

<mosaic_0001>
module attributes {stable_mosaic.version = 11 : i64} {
  func.func @bayesian_nn_kernel(%arg0: i32, %arg1: memref<1x256xf32, #tpu.memory_space<vmem>>, %arg2: memref<256x1xf32, #tpu.memory_space<vmem>>, %arg3: memref<256x1xf32, #tpu.memory_space<vmem>>, %arg4: memref<16x256xf32, #tpu.memory_space<vmem>>, %arg5: memref<16x1xf32, #tpu.memory_space<vmem>>, %arg6: memref<16x16xf32, #tpu.memory_space<vmem>>, %arg7: memref<16x1xf32, #tpu.memory_space<vmem>>, %arg8: memref<16x1xf32, #tpu.memory_space<vmem>>, %arg9: memref<2xf32, #tpu.memory_space<smem>>, %arg10: memref<1x256xf32, #tpu.memory_space<vmem>>) attributes {dimension_semantics = [#tpu.dimension_semantics<parallel>], iteration_bounds = array<i64: 2>, scalar_prefetch = 0 : i64, scratch_operands = 0 : i64, tpu.core_type = #tpu.core_type<tc>, window_params = [{transform_indices = @transform_0, window_bounds = array<i64: 1, 256>}, {pipeline_mode = #tpu.pipeline_mode<synchronous>, transform_indices = @transform_1, window_bounds = array<i64: 256, 1>}, {pipeline_mode = #tpu.pipeline_mode<synchronous>, transform_indices = @transform_2, window_bounds = array<i64: 256, 1>}, {pipeline_mode = #tpu.pipeline_mode<synchronous>, transform_indices = @transform_3, window_bounds = array<i64: 16, 256>}, {pipeline_mode = #tpu.pipeline_mode<synchronous>, transform_indices = @transform_4, window_bounds = array<i64: 16, 1>}, {pipeline_mode = #tpu.pipeline_mode<synchronous>, transform_indices = @transform_5, window_bounds = array<i64: 16, 16>}, {pipeline_mode = #tpu.pipeline_mode<synchronous>, transform_indices = @transform_6, window_bounds = array<i64: 16, 1>}, {pipeline_mode = #tpu.pipeline_mode<synchronous>, transform_indices = @transform_7, window_bounds = array<i64: 16, 1>}, {transform_indices = @transform_8, window_bounds = array<i64: 2>}, {transform_indices = @transform_9, window_bounds = array<i64: 1, 256>}]} {
    %c0 = arith.constant 0 : index
    %c0_0 = arith.constant 0 : index
    %0 = vector.load %arg1[%c0, %c0_0] : memref<1x256xf32, #tpu.memory_space<vmem>>, vector<1x256xf32>
    %c0_1 = arith.constant 0 : index
    %c0_2 = arith.constant 0 : index
    %1 = vector.load %arg2[%c0_1, %c0_2] : memref<256x1xf32, #tpu.memory_space<vmem>>, vector<256x1xf32>
    %2 = vector.broadcast %1 : vector<256x1xf32> to vector<256x256xf32>
    %3 = vector.broadcast %0 : vector<1x256xf32> to vector<256x256xf32>
    %4 = arith.subf %2, %3 : vector<256x256xf32>
    %5 = arith.mulf %4, %4 : vector<256x256xf32>
    %c0_3 = arith.constant 0 : index
    %c0_4 = arith.constant 0 : index
    %6 = vector.load %arg3[%c0_3, %c0_4] : memref<256x1xf32, #tpu.memory_space<vmem>>, vector<256x1xf32>
    %7 = vector.broadcast %6 : vector<256x1xf32> to vector<256x256xf32>
    %8 = arith.mulf %5, %7 : vector<256x256xf32>
    %9 = math.exp %8 : vector<256x256xf32>
    %c0_5 = arith.constant 0 : index
    %c0_6 = arith.constant 0 : index
    %10 = vector.load %arg4[%c0_5, %c0_6] : memref<16x256xf32, #tpu.memory_space<vmem>>, vector<16x256xf32>
    %cst = arith.constant dense<0.000000e+00> : vector<16x256xf32>
    %11 = tpu.matmul %10, %9, %cst {dimension_numbers = #tpu.dot_dimension_numbers<[1], [0], [0], [1], [0, 0, 1, 1], [], []>} : vector<16x256xf32>, vector<256x256xf32>, vector<16x256xf32> -> vector<16x256xf32>
    %c0_7 = arith.constant 0 : index
    %c0_8 = arith.constant 0 : index
    %12 = vector.load %arg5[%c0_7, %c0_8] : memref<16x1xf32, #tpu.memory_space<vmem>>, vector<16x1xf32>
    %13 = vector.broadcast %12 : vector<16x1xf32> to vector<16x256xf32>
    %14 = arith.addf %11, %13 : vector<16x256xf32>
    %15 = vector.extract_strided_slice %14 {offsets = [0, 0], sizes = [5, 256], strides = [1, 1]} : vector<16x256xf32> to vector<5x256xf32>
    %cst_9 = arith.constant 4.000000e-05 : f32
    %16 = vector.broadcast %cst_9 : f32 to vector<5x256xf32>
    %17 = arith.mulf %15, %16 : vector<5x256xf32>
    %cst_10 = arith.constant 2.314000e-06 : f32
    %18 = vector.broadcast %cst_10 : f32 to vector<5x256xf32>
    %19 = arith.mulf %18, %17 : vector<5x256xf32>
    %cst_11 = arith.constant -3.295000e-04 : f32
    %20 = vector.broadcast %cst_11 : f32 to vector<5x256xf32>
    %21 = arith.addf %19, %20 : vector<5x256xf32>
    %22 = arith.mulf %21, %17 : vector<5x256xf32>
    %cst_12 = arith.constant -3.990000e-03 : f32
    %23 = vector.broadcast %cst_12 : f32 to vector<5x256xf32>
    %24 = arith.addf %22, %23 : vector<5x256xf32>
    %25 = arith.mulf %24, %17 : vector<5x256xf32>
    %cst_13 = arith.constant 2.537000e+00 : f32
    %26 = vector.broadcast %cst_13 : f32 to vector<5x256xf32>
    %27 = arith.addf %25, %26 : vector<5x256xf32>
    %28 = arith.mulf %27, %17 : vector<5x256xf32>
    %cst_14 = arith.constant 1.921000e+01 : f32
    %29 = vector.broadcast %cst_14 : f32 to vector<5x256xf32>
    %30 = arith.addf %28, %29 : vector<5x256xf32>
    %cst_15 = arith.constant 0.000000e+00 : f32
    %31 = vector.broadcast %cst_15 : f32 to vector<2x256xf32>
    %32 = vector.extract_strided_slice %14 {offsets = [0, 0], sizes = [9, 256], strides = [1, 1]} : vector<16x256xf32> to vector<9x256xf32>
    %33 = tpu.concatenate %32, %30, %31 in 0 : vector<9x256xf32>, vector<5x256xf32>, vector<2x256xf32> -> vector<16x256xf32>
    %c0_16 = arith.constant 0 : index
    %c0_17 = arith.constant 0 : index
    %34 = vector.load %arg6[%c0_16, %c0_17] : memref<16x16xf32, #tpu.memory_space<vmem>>, vector<16x16xf32>
    %cst_18 = arith.constant dense<0.000000e+00> : vector<16x256xf32>
    %35 = tpu.matmul %34, %33, %cst_18 {dimension_numbers = #tpu.dot_dimension_numbers<[1], [0], [0], [1], [0, 0, 1, 1], [], []>} : vector<16x16xf32>, vector<16x256xf32>, vector<16x256xf32> -> vector<16x256xf32>
    %36 = arith.mulf %33, %33 : vector<16x256xf32>
    %cst_19 = arith.constant dense<0.000000e+00> : vector<256xf32>
    %37 = vector.multi_reduction <add>, %36, %cst_19 [0] : vector<16x256xf32> to vector<256xf32>
    %38 = vector.shape_cast %37 : vector<256xf32> to vector<1x256xf32>
    %c0_20 = arith.constant 0 : index
    %c0_21 = arith.constant 0 : index
    %39 = vector.load %arg7[%c0_20, %c0_21] : memref<16x1xf32, #tpu.memory_space<vmem>>, vector<16x1xf32>
    %40 = vector.broadcast %39 : vector<16x1xf32> to vector<16x256xf32>
    %41 = vector.broadcast %38 : vector<1x256xf32> to vector<16x256xf32>
    %42 = arith.addf %40, %41 : vector<16x256xf32>
    %cst_22 = arith.constant 2.000000e+00 : f32
    %43 = vector.broadcast %cst_22 : f32 to vector<16x256xf32>
    %44 = arith.mulf %43, %35 : vector<16x256xf32>
    %45 = arith.subf %42, %44 : vector<16x256xf32>
    %cst_23 = arith.constant 0.000000e+00 : f32
    %46 = vector.broadcast %cst_23 : f32 to vector<16x256xf32>
    %47 = arith.maximumf %45, %46 : vector<16x256xf32>
    %c0_24 = arith.constant 0 : index
    %48 = memref.load %arg9[%c0_24] : memref<2xf32, #tpu.memory_space<smem>>
    %c1 = arith.constant 1 : index
    %49 = memref.load %arg9[%c1] : memref<2xf32, #tpu.memory_space<smem>>
    %50 = vector.broadcast %48 : f32 to vector<16x256xf32>
    %51 = arith.mulf %47, %50 : vector<16x256xf32>
    %52 = math.exp %51 : vector<16x256xf32>
    %c0_25 = arith.constant 0 : index
    %c0_26 = arith.constant 0 : index
    %53 = vector.load %arg8[%c0_25, %c0_26] : memref<16x1xf32, #tpu.memory_space<vmem>>, vector<16x1xf32>
    %54 = vector.broadcast %53 : vector<16x1xf32> to vector<16x256xf32>
    %55 = arith.mulf %54, %52 : vector<16x256xf32>
    %cst_27 = arith.constant dense<0.000000e+00> : vector<256xf32>
    %56 = vector.multi_reduction <add>, %55, %cst_27 [0] : vector<16x256xf32> to vector<256xf32>
    %57 = vector.shape_cast %56 : vector<256xf32> to vector<1x256xf32>
    %58 = vector.broadcast %49 : f32 to vector<1x256xf32>
    %59 = arith.addf %57, %58 : vector<1x256xf32>
    %c0_28 = arith.constant 0 : index
    %c0_29 = arith.constant 0 : index
    %60 = vector.load %arg10[%c0_28, %c0_29] : memref<1x256xf32, #tpu.memory_space<vmem>>, vector<1x256xf32>
    tpu.vector_store %arg10[%c0_28, %c0_29], %59 {strides = array<i32>} : memref<1x256xf32, #tpu.memory_space<vmem>>, vector<1x256xf32>,
    return
  }
  func.func @transform_0(%arg0: i32) -> (i32, i32) {
    %c0_i32 = arith.constant 0 : i32
    %c0_i32_0 = arith.constant 0 : i32
    return %c0_i32, %arg0 : i32, i32
  }
  func.func @transform_1(%arg0: i32) -> (i32, i32) {
    %c0_i32 = arith.constant 0 : i32
    %c0_i32_0 = arith.constant 0 : i32
    %c0_i32_1 = arith.constant 0 : i32
    return %c0_i32, %c0_i32_0 : i32, i32
  }
  func.func @transform_2(%arg0: i32) -> (i32, i32) {
    %c0_i32 = arith.constant 0 : i32
    %c0_i32_0 = arith.constant 0 : i32
    %c0_i32_1 = arith.constant 0 : i32
    return %c0_i32, %c0_i32_0 : i32, i32
  }
  func.func @transform_3(%arg0: i32) -> (i32, i32) {
    %c0_i32 = arith.constant 0 : i32
    %c0_i32_0 = arith.constant 0 : i32
    %c0_i32_1 = arith.constant 0 : i32
    return %c0_i32, %c0_i32_0 : i32, i32
  }
  func.func @transform_4(%arg0: i32) -> (i32, i32) {
    %c0_i32 = arith.constant 0 : i32
    %c0_i32_0 = arith.constant 0 : i32
    %c0_i32_1 = arith.constant 0 : i32
    return %c0_i32, %c0_i32_0 : i32, i32
  }
  func.func @transform_5(%arg0: i32) -> (i32, i32) {
    %c0_i32 = arith.constant 0 : i32
    %c0_i32_0 = arith.constant 0 : i32
    %c0_i32_1 = arith.constant 0 : i32
    return %c0_i32, %c0_i32_0 : i32, i32
  }
  func.func @transform_6(%arg0: i32) -> (i32, i32) {
    %c0_i32 = arith.constant 0 : i32
    %c0_i32_0 = arith.constant 0 : i32
    %c0_i32_1 = arith.constant 0 : i32
    return %c0_i32, %c0_i32_0 : i32, i32
  }
  func.func @transform_7(%arg0: i32) -> (i32, i32) {
    %c0_i32 = arith.constant 0 : i32
    %c0_i32_0 = arith.constant 0 : i32
    %c0_i32_1 = arith.constant 0 : i32
    return %c0_i32, %c0_i32_0 : i32, i32
  }
  func.func @transform_8(%arg0: i32) -> i32 {
    %c0_i32 = arith.constant 0 : i32
    %c0_i32_0 = arith.constant 0 : i32
    return %c0_i32 : i32
  }
  func.func @transform_9(%arg0: i32) -> (i32, i32) {
    %c0_i32 = arith.constant 0 : i32
    %c0_i32_0 = arith.constant 0 : i32
    return %c0_i32, %arg0 : i32, i32
  }
}

</mosaic_0001>

<llo_original>
// kernel: tpu_custom_call.1
$region0: #{tpu_custom_call.1}
  #allocation0 [shape = 'u32[]', space=smem, size = 0x4, offset = 0x4, fixed_abs, tag = 'smem constant byte address 0x4 - core index']
  #allocation1 [shape = 'u32[144,128]{1,0:T(1,128)}', space=vmem, size = 0x12000, scoped, tag = 'internal scratch']
  %s0 = inlined_call_operand.vmem [shape: f32[1,512], index: 0, kind: input, shape index: {}]
  %s1 = inlined_call_operand.vmem [shape: f32[256,1], index: 1, kind: input, shape index: {}]
  %s2 = inlined_call_operand.vmem [shape: f32[256,1], index: 2, kind: input, shape index: {}]
  %s3 = inlined_call_operand.vmem [shape: f32[16,256], index: 3, kind: input, shape index: {}]
  %s4 = inlined_call_operand.vmem [shape: f32[16,1], index: 4, kind: input, shape index: {}]
  %s5 = inlined_call_operand.vmem [shape: f32[16,16], index: 5, kind: input, shape index: {}]
  %s6 = inlined_call_operand.vmem [shape: f32[16,1], index: 6, kind: input, shape index: {}]
  %s7 = inlined_call_operand.vmem [shape: f32[16,1], index: 7, kind: input, shape index: {}]
  %s8 = inlined_call_operand.vmem [shape: f32[2], index: 8, kind: input, shape index: {}]
  %s9 = inlined_call_operand.hbm [shape: f32[1,512], index: 9, kind: output, shape index: {}]
  %s10 = sld [smem:[#allocation0]]
  $region73: #{tpu_custom_call.1} parent=0
    _
  %s12 = ssub.s32 1, %s10
  %s13 = scalar_select 0, %s12, %s10
  $region1: #{tpu_custom_call.1} parent=0
    #allocation2 [shape = 'u8[512]{0}', space=smem, size = 0x200, scoped, tag = 'input window, operand 8, single buffered']
    #allocation3 [shape = 's32[2]{0}', space=sflag, size = 0x8, scoped, tag = 'scoped memory for tpu_custom_call.1']
    #allocation4 [shape = 's32[2]{0}', space=sflag, size = 0x8, scoped, tag = 'scoped memory for tpu_custom_call.1']
    #allocation5 [shape = 'u8[2048]{0}', space=vmem, size = 0x800, scoped, tag = 'output window, operand 0']
    %14 = vsyncpa [#allocation4], 0
    %15 = vsyncpa [#allocation3], 0
    %s16 = scalar_lea.sflag [#allocation3], 1
    %17 = vsyncpa %s16, 0
    loop: start=0, step=1, limit=4
    $region2: #{tpu_custom_call.1} parent=1 // loop_pre_header
      _
    $region3: #{tpu_custom_call.1} parent=1 // loop_header
      %s19 = sphi 0, %s23
      %p20 = scmp.ge.s32.totalorder %s19, 4
      %s29 = sphi 0, %s31
      %s32 = sphi 0, %s29
      %s33 = sphi 0, %s32
      %s49 = sphi 0, %s33
      %s53 = sphi 0, %s53
      %s55 = sphi 0, %s53
      %s56 = sphi 0, %s55
      %s70 = sphi 0, %s56
      %s74 = sphi 0, %s74
      %s76 = sphi 0, %s74
      %s77 = sphi 0, %s76
      %s91 = sphi 0, %s77
      %s95 = sphi 0, %s95
      %s97 = sphi 0, %s95
      %s98 = sphi 0, %s97
      %s112 = sphi 0, %s98
      %s116 = sphi 0, %s116
      %s118 = sphi 0, %s116
      %s119 = sphi 0, %s118
      %s133 = sphi 0, %s119
      %s137 = sphi 0, %s137
      %s139 = sphi 0, %s137
      %s140 = sphi 0, %s139
      %s154 = sphi 0, %s140
      %s158 = sphi 0, %s158
      %s160 = sphi 0, %s158
      %s161 = sphi 0, %s160
      %s175 = sphi 0, %s161
      %s179 = sphi 0, %s179
      %s181 = sphi 0, %s179
      %s182 = sphi 0, %s181
      %s196 = sphi 0, %s182
      %s200 = sphi 0, %s200
      %s202 = sphi 0, %s200
      %s203 = sphi 0, %s202
      %s217 = sphi 0, %s203
      %s223 = sphi 0, %s225
      %s226 = sphi 0, %s223
      %s227 = sphi 0, %s226
      %s243 = sphi 0, %s227
    $region4: #{tpu_custom_call.1} parent=1 // loop_header_branch
      %22 = sbr.rel (%p20) target = $region8
    $region5: #{tpu_custom_call.1} parent=1 // loop_body
      %s24 = ssub.s32 %s19, 1
      %s25 = ssub.s32 %s19, 2
      %s26 = sadd.s32 %s19, 1
      %s27 = ssub.s32 %s19, %s26
      %p28 = scmp.eq.s32.totalorder %s27, 0
      %s30 = sadd.s32 %s29, 1
      %s31 = scalar_select %p28, %s29, %s30
      %p34 = pneg %p28
      %p35 = scmp.eq.s32.totalorder %s19, 1
      %p36 = por %p34, %p35
      %p37 = scmp.ne.s32.totalorder %s29, %s32
      %p38 = scmp.eq.s32.totalorder %s19, 0
      %p39 = por %p37, %p38
      %p40 = scmp.ne.s32.totalorder %s29, %s32
      %p41 = scmp.eq.s32.totalorder %s24, 1
      %p42 = por %p40, %p41
      %p43 = scmp.ne.s32.totalorder %s32, %s33
      %p44 = scmp.eq.s32.totalorder %s24, 0
      %p45 = por %p43, %p44
      %p46 = scmp.ne.s32.totalorder %s32, %s33
      %p47 = scmp.eq.s32.totalorder %s25, 1
      %p48 = por %p46, %p47
      %p50 = scmp.ne.s32.totalorder %s33, %s49
      %p51 = scmp.eq.s32.totalorder %s25, 0
      %p52 = por %p50, %p51
      %s54 = sadd.s32 %s53, 1
      %p57 = scmp.eq.s32.totalorder %s19, 1
      %p58 = scmp.ne.s32.totalorder %s53, %s55
      %p59 = scmp.eq.s32.totalorder %s19, 0
      %p60 = por %p58, %p59
      %p61 = scmp.ne.s32.totalorder %s53, %s55
      %p62 = scmp.eq.s32.totalorder %s24, 1
      %p63 = por %p61, %p62
      %p64 = scmp.ne.s32.totalorder %s55, %s56
      %p65 = scmp.eq.s32.totalorder %s24, 0
      %p66 = por %p64, %p65
      %p67 = scmp.ne.s32.totalorder %s55, %s56
      %p68 = scmp.eq.s32.totalorder %s25, 1
      %p69 = por %p67, %p68
      %p71 = scmp.ne.s32.totalorder %s56, %s70
      %p72 = scmp.eq.s32.totalorder %s25, 0
      %p73 = por %p71, %p72
      %s75 = sadd.s32 %s74, 1
      %p78 = scmp.eq.s32.totalorder %s19, 1
      %p79 = scmp.ne.s32.totalorder %s74, %s76
      %p80 = scmp.eq.s32.totalorder %s19, 0
      %p81 = por %p79, %p80
      %p82 = scmp.ne.s32.totalorder %s74, %s76
      %p83 = scmp.eq.s32.totalorder %s24, 1
      %p84 = por %p82, %p83
      %p85 = scmp.ne.s32.totalorder %s76, %s77
      %p86 = scmp.eq.s32.totalorder %s24, 0
      %p87 = por %p85, %p86
      %p88 = scmp.ne.s32.totalorder %s76, %s77
      %p89 = scmp.eq.s32.totalorder %s25, 1
      %p90 = por %p88, %p89
      %p92 = scmp.ne.s32.totalorder %s77, %s91
      %p93 = scmp.eq.s32.totalorder %s25, 0
      %p94 = por %p92, %p93
      %s96 = sadd.s32 %s95, 1
      %p99 = scmp.eq.s32.totalorder %s19, 1
      %p100 = scmp.ne.s32.totalorder %s95, %s97
      %p101 = scmp.eq.s32.totalorder %s19, 0
      %p102 = por %p100, %p101
      %p103 = scmp.ne.s32.totalorder %s95, %s97
      %p104 = scmp.eq.s32.totalorder %s24, 1
      %p105 = por %p103, %p104
      %p106 = scmp.ne.s32.totalorder %s97, %s98
      %p107 = scmp.eq.s32.totalorder %s24, 0
      %p108 = por %p106, %p107
      %p109 = scmp.ne.s32.totalorder %s97, %s98
      %p110 = scmp.eq.s32.totalorder %s25, 1
      %p111 = por %p109, %p110
      %p113 = scmp.ne.s32.totalorder %s98, %s112
      %p114 = scmp.eq.s32.totalorder %s25, 0
      %p115 = por %p113, %p114
      %s117 = sadd.s32 %s116, 1
      %p120 = scmp.eq.s32.totalorder %s19, 1
      %p121 = scmp.ne.s32.totalorder %s116, %s118
      %p122 = scmp.eq.s32.totalorder %s19, 0
      %p123 = por %p121, %p122
      %p124 = scmp.ne.s32.totalorder %s116, %s118
      %p125 = scmp.eq.s32.totalorder %s24, 1
      %p126 = por %p124, %p125
      %p127 = scmp.ne.s32.totalorder %s118, %s119
      %p128 = scmp.eq.s32.totalorder %s24, 0
      %p129 = por %p127, %p128
      %p130 = scmp.ne.s32.totalorder %s118, %s119
      %p131 = scmp.eq.s32.totalorder %s25, 1
      %p132 = por %p130, %p131
      %p134 = scmp.ne.s32.totalorder %s119, %s133
      %p135 = scmp.eq.s32.totalorder %s25, 0
      %p136 = por %p134, %p135
      %s138 = sadd.s32 %s137, 1
      %p141 = scmp.eq.s32.totalorder %s19, 1
      %p142 = scmp.ne.s32.totalorder %s137, %s139
      %p143 = scmp.eq.s32.totalorder %s19, 0
      %p144 = por %p142, %p143
      %p145 = scmp.ne.s32.totalorder %s137, %s139
      %p146 = scmp.eq.s32.totalorder %s24, 1
      %p147 = por %p145, %p146
      %p148 = scmp.ne.s32.totalorder %s139, %s140
      %p149 = scmp.eq.s32.totalorder %s24, 0
      %p150 = por %p148, %p149
      %p151 = scmp.ne.s32.totalorder %s139, %s140
      %p152 = scmp.eq.s32.totalorder %s25, 1
      %p153 = por %p151, %p152
      %p155 = scmp.ne.s32.totalorder %s140, %s154
      %p156 = scmp.eq.s32.totalorder %s25, 0
      %p157 = por %p155, %p156
      %s159 = sadd.s32 %s158, 1
      %p162 = scmp.eq.s32.totalorder %s19, 1
      %p163 = scmp.ne.s32.totalorder %s158, %s160
      %p164 = scmp.eq.s32.totalorder %s19, 0
      %p165 = por %p163, %p164
      %p166 = scmp.ne.s32.totalorder %s158, %s160
      %p167 = scmp.eq.s32.totalorder %s24, 1
      %p168 = por %p166, %p167
      %p169 = scmp.ne.s32.totalorder %s160, %s161
      %p170 = scmp.eq.s32.totalorder %s24, 0
      %p171 = por %p169, %p170
      %p172 = scmp.ne.s32.totalorder %s160, %s161
      %p173 = scmp.eq.s32.totalorder %s25, 1
      %p174 = por %p172, %p173
      %p176 = scmp.ne.s32.totalorder %s161, %s175
      %p177 = scmp.eq.s32.totalorder %s25, 0
      %p178 = por %p176, %p177
      %s180 = sadd.s32 %s179, 1
      %p183 = scmp.eq.s32.totalorder %s19, 1
      %p184 = scmp.ne.s32.totalorder %s179, %s181
      %p185 = scmp.eq.s32.totalorder %s19, 0
      %p186 = por %p184, %p185
      %p187 = scmp.ne.s32.totalorder %s179, %s181
      %p188 = scmp.eq.s32.totalorder %s24, 1
      %p189 = por %p187, %p188
      %p190 = scmp.ne.s32.totalorder %s181, %s182
      %p191 = scmp.eq.s32.totalorder %s24, 0
      %p192 = por %p190, %p191
      %p193 = scmp.ne.s32.totalorder %s181, %s182
      %p194 = scmp.eq.s32.totalorder %s25, 1
      %p195 = por %p193, %p194
      %p197 = scmp.ne.s32.totalorder %s182, %s196
      %p198 = scmp.eq.s32.totalorder %s25, 0
      %p199 = por %p197, %p198
      %s201 = sadd.s32 %s200, 1
      %p204 = scmp.eq.s32.totalorder %s19, 1
      %p205 = scmp.ne.s32.totalorder %s200, %s202
      %p206 = scmp.eq.s32.totalorder %s19, 0
      %p207 = por %p205, %p206
      %p208 = scmp.ne.s32.totalorder %s200, %s202
      %p209 = scmp.eq.s32.totalorder %s24, 1
      %p210 = por %p208, %p209
      %p211 = scmp.ne.s32.totalorder %s202, %s203
      %p212 = scmp.eq.s32.totalorder %s24, 0
      %p213 = por %p211, %p212
      %p214 = scmp.ne.s32.totalorder %s202, %s203
      %p215 = scmp.eq.s32.totalorder %s25, 1
      %p216 = por %p214, %p215
      %p218 = scmp.ne.s32.totalorder %s203, %s217
      %p219 = scmp.eq.s32.totalorder %s25, 0
      %p220 = por %p218, %p219
      %s221 = ssub.s32 %s19, %s26
      %p222 = scmp.eq.s32.totalorder %s221, 0
      %s224 = sadd.s32 %s223, 1
      %s225 = scalar_select %p222, %s223, %s224
      %p228 = pneg %p222
      %p229 = scmp.eq.s32.totalorder %s19, 1
      %p230 = por %p228, %p229
      %p231 = scmp.ne.s32.totalorder %s223, %s226
      %p232 = scmp.eq.s32.totalorder %s19, 0
      %p233 = por %p231, %p232
      %p234 = scmp.ne.s32.totalorder %s223, %s226
      %p235 = scmp.eq.s32.totalorder %s24, 1
      %p236 = por %p234, %p235
      %p237 = scmp.ne.s32.totalorder %s226, %s227
      %p238 = scmp.eq.s32.totalorder %s24, 0
      %p239 = por %p237, %p238
      %p240 = scmp.ne.s32.totalorder %s226, %s227
      %p241 = scmp.eq.s32.totalorder %s25, 1
      %p242 = por %p240, %p241
      %p244 = scmp.ne.s32.totalorder %s227, %s243
      %p245 = scmp.eq.s32.totalorder %s25, 0
      %p246 = por %p244, %p245
      %p247 = scmp.le.s32.totalorder 1, %s19
      %p248 = scmp.lt.s32.totalorder %s19, 3
      %p249 = pnand %p247, %p248
      %p250 = pneg %p249
      // Predicated region
      $region9: #{tpu_custom_call.1} parent=5 // pred_check
        _
      $region10: #{tpu_custom_call.1} parent=5 // pred_check_branch
        %252 = sbr.rel (%p249) target = $region12
      $region11: #{tpu_custom_call.1} parent=5 // pred_region
        %s253 = ssub.s32 %s19, 1
        // Predicated region
        $region13: #{tpu_custom_call.1} parent=11 // pred_check
          %p254 = pneg %p66
        $region14: #{tpu_custom_call.1} parent=11 // pred_check_branch
          %256 = sbr.rel (%p254) target = $region16
        $region15: #{tpu_custom_call.1} parent=11 // pred_region
          _
        $region16: #{tpu_custom_call.1} parent=11 // pred_fallthru
          _
        // Predicated region
        $region17: #{tpu_custom_call.1} parent=11 // pred_check
          %p257 = pneg %p87
        $region18: #{tpu_custom_call.1} parent=11 // pred_check_branch
          %259 = sbr.rel (%p257) target = $region20
        $region19: #{tpu_custom_call.1} parent=11 // pred_region
          _
        $region20: #{tpu_custom_call.1} parent=11 // pred_fallthru
          _
        // Predicated region
        $region21: #{tpu_custom_call.1} parent=11 // pred_check
          %p260 = pneg %p108
        $region22: #{tpu_custom_call.1} parent=11 // pred_check_branch
          %262 = sbr.rel (%p260) target = $region24
        $region23: #{tpu_custom_call.1} parent=11 // pred_region
          _
        $region24: #{tpu_custom_call.1} parent=11 // pred_fallthru
          _
        // Predicated region
        $region25: #{tpu_custom_call.1} parent=11 // pred_check
          %p263 = pneg %p129
        $region26: #{tpu_custom_call.1} parent=11 // pred_check_branch
          %265 = sbr.rel (%p263) target = $region28
        $region27: #{tpu_custom_call.1} parent=11 // pred_region
          _
        $region28: #{tpu_custom_call.1} parent=11 // pred_fallthru
          _
        // Predicated region
        $region29: #{tpu_custom_call.1} parent=11 // pred_check
          %p266 = pneg %p150
        $region30: #{tpu_custom_call.1} parent=11 // pred_check_branch
          %268 = sbr.rel (%p266) target = $region32
        $region31: #{tpu_custom_call.1} parent=11 // pred_region
          _
        $region32: #{tpu_custom_call.1} parent=11 // pred_fallthru
          _
        // Predicated region
        $region33: #{tpu_custom_call.1} parent=11 // pred_check
          %p269 = pneg %p171
        $region34: #{tpu_custom_call.1} parent=11 // pred_check_branch
          %271 = sbr.rel (%p269) target = $region36
        $region35: #{tpu_custom_call.1} parent=11 // pred_region
          _
        $region36: #{tpu_custom_call.1} parent=11 // pred_fallthru
          _
        // Predicated region
        $region37: #{tpu_custom_call.1} parent=11 // pred_check
          %p272 = pneg %p192
        $region38: #{tpu_custom_call.1} parent=11 // pred_check_branch
          %274 = sbr.rel (%p272) target = $region40
        $region39: #{tpu_custom_call.1} parent=11 // pred_region
          _
        $region40: #{tpu_custom_call.1} parent=11 // pred_fallthru
          _
        // Predicated region
        $region41: #{tpu_custom_call.1} parent=11 // pred_check
          %p275 = pneg %p213
        $region42: #{tpu_custom_call.1} parent=11 // pred_check_branch
          %277 = sbr.rel (%p275) target = $region44
        $region43: #{tpu_custom_call.1} parent=11 // pred_region
          %s279 = ssub.s32 16, 16
          %280 = vsyncadd [#allocation4], %s279
          %s282 = sshll.u32 %s8, 4
          %s283 = int_to_ptr.vmem [resolvable:$true] %s282
          %285 = dma.vmem_to_smem %s283, 16, [#allocation2], [#allocation4]
        $region44: #{tpu_custom_call.1} parent=11 // pred_fallthru
          _
      $region12: #{tpu_custom_call.1} parent=5 // pred_fallthru
        _
      %p286 = scmp.lt.s32.totalorder %s19, 2
      // Predicated region
      $region45: #{tpu_custom_call.1} parent=5 // pred_check
        %p287 = pneg %p286
      $region46: #{tpu_custom_call.1} parent=5 // pred_check_branch
        %289 = sbr.rel (%p287) target = $region48
      $region47: #{tpu_custom_call.1} parent=5 // pred_region
        // Predicated region
        $region49: #{tpu_custom_call.1} parent=47 // pred_check
          %p290 = pneg %p39
        $region50: #{tpu_custom_call.1} parent=47 // pred_check_branch
          %292 = sbr.rel (%p290) target = $region52
        $region51: #{tpu_custom_call.1} parent=47 // pred_region
          %s293 = smul.u32 2, %s19
          %p294 = scmp.lt.s32.totalorder %s293, 3
          %s295 = scalar_select %p294, %s293, 3
          %s296 = scalar_lea.vmem %s0, %s295
          %s297 = smul.u32 2, %s19
        $region52: #{tpu_custom_call.1} parent=47 // pred_fallthru
          _
      $region48: #{tpu_custom_call.1} parent=5 // pred_fallthru
        _
      %p298 = scmp.le.s32.totalorder 1, %s19
      %p299 = scmp.lt.s32.totalorder %s19, 3
      %p300 = pnand %p298, %p299
      %p301 = pneg %p300
      // Predicated region
      $region53: #{tpu_custom_call.1} parent=5 // pred_check
        _
      $region54: #{tpu_custom_call.1} parent=5 // pred_check_branch
        %303 = sbr.rel (%p300) target = $region56
      $region55: #{tpu_custom_call.1} parent=5 // pred_region
        %s304 = ssub.s32 %s19, 1
        // Predicated region
        $region57: #{tpu_custom_call.1} parent=55 // pred_check
          %p305 = pneg %p213
        $region58: #{tpu_custom_call.1} parent=55 // pred_check_branch
          %307 = sbr.rel (%p305) target = $region60
        $region59: #{tpu_custom_call.1} parent=55 // pred_region
          %308 = dma.done [#allocation4], 16
        $region60: #{tpu_custom_call.1} parent=55 // pred_fallthru
          _
        %309 = sfence
        %s310 = smul.u32 2, %s24
        %p311 = scmp.lt.s32.totalorder %s310, 3
        %s312 = scalar_select %p311, %s310, 3
        %s313 = scalar_lea.vmem %s0, %s312
        %p314 = pneg %p45
        %p315 = pneg %p42
        %p316 = pneg %p66
        %p317 = pneg %p63
        %p318 = pneg %p87
        %p319 = pneg %p84
        %p320 = pneg %p108
        %p321 = pneg %p105
        %p322 = pneg %p129
        %p323 = pneg %p126
        %p324 = pneg %p150
        %p325 = pneg %p147
        %p326 = pneg %p171
        %p327 = pneg %p168
        %p328 = pneg %p192
        %p329 = pneg %p189
        %p330 = pneg %p213
        %p331 = pneg %p210
        %p332 = pneg %p239
        %p333 = pneg %p236
        %s334 = sand.u32 %s226, 1
        %s335 = scalar_lea.sflag [#allocation3], %s334
        %s336 = sand.u32 %s226, 1
        %s337 = smul.addr %s336, 2
        %s338 = scalar_lea.vmem [#allocation5], %s337
        %s339 = smul.u32 2, %s24
        %p340 = scmp.lt.s32.totalorder %s339, 3
        %s341 = scalar_select %p340, %s339, 3
        %s342 = scalar_lea.vmem %s0, %s341
        %s343 = smul.u32 2, %s24
        %s344 = smul.u32 2, %s24
        %v345 = vld [vmem:[%s342] sm:$0x3]
        %v346 = vld [vmem:[%s1] sm:$0xff]
        %v347 = vld [vmem:[%s1 + $0x8] sm:$0xff]
        %v348 = vld [vmem:[%s1 + $0x10] sm:$0xff]
        %v349 = vld [vmem:[%s1 + $0x18] sm:$0xff]
        %v350 = vld [vmem:[%s1 + $0x20] sm:$0xff]
        %v351 = vld [vmem:[%s1 + $0x28] sm:$0xff]
        %v352 = vld [vmem:[%s1 + $0x30] sm:$0xff]
        %v353 = vld [vmem:[%s1 + $0x38] sm:$0xff]
        %v354 = vld [vmem:[%s1 + $0x40] sm:$0xff]
        %v355 = vld [vmem:[%s1 + $0x48] sm:$0xff]
        %v356 = vld [vmem:[%s1 + $0x50] sm:$0xff]
        %v357 = vld [vmem:[%s1 + $0x58] sm:$0xff]
        %v358 = vld [vmem:[%s1 + $0x60] sm:$0xff]
        %v359 = vld [vmem:[%s1 + $0x68] sm:$0xff]
        %v360 = vld [vmem:[%s1 + $0x70] sm:$0xff]
        %v361 = vld [vmem:[%s1 + $0x78] sm:$0xff]
        %v362 = vld [vmem:[%s1 + $0x80] sm:$0xff]
        %v363 = vld [vmem:[%s1 + $0x88] sm:$0xff]
        %v364 = vld [vmem:[%s1 + $0x90] sm:$0xff]
        %v365 = vld [vmem:[%s1 + $0x98] sm:$0xff]
        %v366 = vld [vmem:[%s1 + $0xa0] sm:$0xff]
        %v367 = vld [vmem:[%s1 + $0xa8] sm:$0xff]
        %v368 = vld [vmem:[%s1 + $0xb0] sm:$0xff]
        %v369 = vld [vmem:[%s1 + $0xb8] sm:$0xff]
        %v370 = vld [vmem:[%s1 + $0xc0] sm:$0xff]
        %v371 = vld [vmem:[%s1 + $0xc8] sm:$0xff]
        %v372 = vld [vmem:[%s1 + $0xd0] sm:$0xff]
        %v373 = vld [vmem:[%s1 + $0xd8] sm:$0xff]
        %v374 = vld [vmem:[%s1 + $0xe0] sm:$0xff]
        %v375 = vld [vmem:[%s1 + $0xe8] sm:$0xff]
        %v376 = vld [vmem:[%s1 + $0xf0] sm:$0xff]
        %v377 = vld [vmem:[%s1 + $0xf8] sm:$0xff]
        %379 = vset.pattern.permute.xlu0 0
        %380 = vperm.xlu0 %379, %v346
        %v381 = vpop.permute.xlu0 %380
        %384 = vset.pattern.permute.xlu0 0
        %385 = vperm.xlu0 %384, %v347
        %v386 = vpop.permute.xlu0 %385
        %389 = vset.pattern.permute.xlu0 0
        %390 = vperm.xlu0 %389, %v348
        %v391 = vpop.permute.xlu0 %390
        %394 = vset.pattern.permute.xlu0 0
        %395 = vperm.xlu0 %394, %v349
        %v396 = vpop.permute.xlu0 %395
        %399 = vset.pattern.permute.xlu0 0
        %400 = vperm.xlu0 %399, %v350
        %v401 = vpop.permute.xlu0 %400
        %404 = vset.pattern.permute.xlu0 0
        %405 = vperm.xlu0 %404, %v351
        %v406 = vpop.permute.xlu0 %405
        %409 = vset.pattern.permute.xlu0 0
        %410 = vperm.xlu0 %409, %v352
        %v411 = vpop.permute.xlu0 %410
        %414 = vset.pattern.permute.xlu0 0
        %415 = vperm.xlu0 %414, %v353
        %v416 = vpop.permute.xlu0 %415
        %419 = vset.pattern.permute.xlu0 0
        %420 = vperm.xlu0 %419, %v354
        %v421 = vpop.permute.xlu0 %420
        %424 = vset.pattern.permute.xlu0 0
        %425 = vperm.xlu0 %424, %v355
        %v426 = vpop.permute.xlu0 %425
        %429 = vset.pattern.permute.xlu0 0
        %430 = vperm.xlu0 %429, %v356
        %v431 = vpop.permute.xlu0 %430
        %434 = vset.pattern.permute.xlu0 0
        %435 = vperm.xlu0 %434, %v357
        %v436 = vpop.permute.xlu0 %435
        %439 = vset.pattern.permute.xlu0 0
        %440 = vperm.xlu0 %439, %v358
        %v441 = vpop.permute.xlu0 %440
        %444 = vset.pattern.permute.xlu0 0
        %445 = vperm.xlu0 %444, %v359
        %v446 = vpop.permute.xlu0 %445
        %449 = vset.pattern.permute.xlu0 0
        %450 = vperm.xlu0 %449, %v360
        %v451 = vpop.permute.xlu0 %450
        %454 = vset.pattern.permute.xlu0 0
        %455 = vperm.xlu0 %454, %v361
        %v456 = vpop.permute.xlu0 %455
        %459 = vset.pattern.permute.xlu0 0
        %460 = vperm.xlu0 %459, %v362
        %v461 = vpop.permute.xlu0 %460
        %464 = vset.pattern.permute.xlu0 0
        %465 = vperm.xlu0 %464, %v363
        %v466 = vpop.permute.xlu0 %465
        %469 = vset.pattern.permute.xlu0 0
        %470 = vperm.xlu0 %469, %v364
        %v471 = vpop.permute.xlu0 %470
        %474 = vset.pattern.permute.xlu0 0
        %475 = vperm.xlu0 %474, %v365
        %v476 = vpop.permute.xlu0 %475
        %479 = vset.pattern.permute.xlu0 0
        %480 = vperm.xlu0 %479, %v366
        %v481 = vpop.permute.xlu0 %480
        %484 = vset.pattern.permute.xlu0 0
        %485 = vperm.xlu0 %484, %v367
        %v486 = vpop.permute.xlu0 %485
        %489 = vset.pattern.permute.xlu0 0
        %490 = vperm.xlu0 %489, %v368
        %v491 = vpop.permute.xlu0 %490
        %494 = vset.pattern.permute.xlu0 0
        %495 = vperm.xlu0 %494, %v369
        %v496 = vpop.permute.xlu0 %495
        %499 = vset.pattern.permute.xlu0 0
        %500 = vperm.xlu0 %499, %v370
        %v501 = vpop.permute.xlu0 %500
        %504 = vset.pattern.permute.xlu0 0
        %505 = vperm.xlu0 %504, %v371
        %v506 = vpop.permute.xlu0 %505
        %509 = vset.pattern.permute.xlu0 0
        %510 = vperm.xlu0 %509, %v372
        %v511 = vpop.permute.xlu0 %510
        %514 = vset.pattern.permute.xlu0 0
        %515 = vperm.xlu0 %514, %v373
        %v516 = vpop.permute.xlu0 %515
        %519 = vset.pattern.permute.xlu0 0
        %520 = vperm.xlu0 %519, %v374
        %v521 = vpop.permute.xlu0 %520
        %524 = vset.pattern.permute.xlu0 0
        %525 = vperm.xlu0 %524, %v375
        %v526 = vpop.permute.xlu0 %525
        %529 = vset.pattern.permute.xlu0 0
        %530 = vperm.xlu0 %529, %v376
        %v531 = vpop.permute.xlu0 %530
        %534 = vset.pattern.permute.xlu0 0
        %535 = vperm.xlu0 %534, %v377
        %v536 = vpop.permute.xlu0 %535
        %v539 = vlaneseq
        %v540 = vshrl.u32 %v539, 7
        %v541 = vsub.s32 0, %v540
        %v542 = vrot.slane %v345, %v541
        %v543 = vlaneseq
        %v544 = vshrl.u32 %v543, 7
        %v545 = vsub.s32 1, %v544
        %v546 = vrot.slane %v345, %v545
        %v549 = vsub.f32 %v381, %v542
        %v550 = vsub.f32 %v381, %v546
        %v551 = vsub.f32 %v386, %v542
        %v552 = vsub.f32 %v386, %v546
        %v553 = vsub.f32 %v391, %v542
        %v554 = vsub.f32 %v391, %v546
        %v555 = vsub.f32 %v396, %v542
        %v556 = vsub.f32 %v396, %v546
        %v557 = vsub.f32 %v401, %v542
        %v558 = vsub.f32 %v401, %v546
        %v559 = vsub.f32 %v406, %v542
        %v560 = vsub.f32 %v406, %v546
        %v561 = vsub.f32 %v411, %v542
        %v562 = vsub.f32 %v411, %v546
        %v563 = vsub.f32 %v416, %v542
        %v564 = vsub.f32 %v416, %v546
        %v565 = vsub.f32 %v421, %v542
        %v566 = vsub.f32 %v421, %v546
        %v567 = vsub.f32 %v426, %v542
        %v568 = vsub.f32 %v426, %v546
        %v569 = vsub.f32 %v431, %v542
        %v570 = vsub.f32 %v431, %v546
        %v571 = vsub.f32 %v436, %v542
        %v572 = vsub.f32 %v436, %v546
        %v573 = vsub.f32 %v441, %v542
        %v574 = vsub.f32 %v441, %v546
        %v575 = vsub.f32 %v446, %v542
        %v576 = vsub.f32 %v446, %v546
        %v577 = vsub.f32 %v451, %v542
        %v578 = vsub.f32 %v451, %v546
        %v579 = vsub.f32 %v456, %v542
        %v580 = vsub.f32 %v456, %v546
        %v581 = vsub.f32 %v461, %v542
        %v582 = vsub.f32 %v461, %v546
        %v583 = vsub.f32 %v466, %v542
        %v584 = vsub.f32 %v466, %v546
        %v585 = vsub.f32 %v471, %v542
        %v586 = vsub.f32 %v471, %v546
        %v587 = vsub.f32 %v476, %v542
        %v588 = vsub.f32 %v476, %v546
        %v589 = vsub.f32 %v481, %v542
        %v590 = vsub.f32 %v481, %v546
        %v591 = vsub.f32 %v486, %v542
        %v592 = vsub.f32 %v486, %v546
        %v593 = vsub.f32 %v491, %v542
        %v594 = vsub.f32 %v491, %v546
        %v595 = vsub.f32 %v496, %v542
        %v596 = vsub.f32 %v496, %v546
        %v597 = vsub.f32 %v501, %v542
        %v598 = vsub.f32 %v501, %v546
        %v599 = vsub.f32 %v506, %v542
        %v600 = vsub.f32 %v506, %v546
        %v601 = vsub.f32 %v511, %v542
        %v602 = vsub.f32 %v511, %v546
        %v603 = vsub.f32 %v516, %v542
        %v604 = vsub.f32 %v516, %v546
        %v605 = vsub.f32 %v521, %v542
        %v606 = vsub.f32 %v521, %v546
        %v607 = vsub.f32 %v526, %v542
        %v608 = vsub.f32 %v526, %v546
        %v609 = vsub.f32 %v531, %v542
        %v610 = vsub.f32 %v531, %v546
        %v611 = vsub.f32 %v536, %v542
        %v612 = vsub.f32 %v536, %v546
        %v613 = vmul.f32 %v549, %v549
        %v614 = vmul.f32 %v550, %v550
        %v615 = vmul.f32 %v551, %v551
        %v616 = vmul.f32 %v552, %v552
        %v617 = vmul.f32 %v553, %v553
        %v618 = vmul.f32 %v554, %v554
        %v619 = vmul.f32 %v555, %v555
        %v620 = vmul.f32 %v556, %v556
        %v621 = vmul.f32 %v557, %v557
        %v622 = vmul.f32 %v558, %v558
        %v623 = vmul.f32 %v559, %v559
        %v624 = vmul.f32 %v560, %v560
        %v625 = vmul.f32 %v561, %v561
        %v626 = vmul.f32 %v562, %v562
        %v627 = vmul.f32 %v563, %v563
        %v628 = vmul.f32 %v564, %v564
        %v629 = vmul.f32 %v565, %v565
        %v630 = vmul.f32 %v566, %v566
        %v631 = vmul.f32 %v567, %v567
        %v632 = vmul.f32 %v568, %v568
        %v633 = vmul.f32 %v569, %v569
        %v634 = vmul.f32 %v570, %v570
        %v635 = vmul.f32 %v571, %v571
        %v636 = vmul.f32 %v572, %v572
        %v637 = vmul.f32 %v573, %v573
        %v638 = vmul.f32 %v574, %v574
        %v639 = vmul.f32 %v575, %v575
        %v640 = vmul.f32 %v576, %v576
        %v641 = vmul.f32 %v577, %v577
        %v642 = vmul.f32 %v578, %v578
        %v643 = vmul.f32 %v579, %v579
        %v644 = vmul.f32 %v580, %v580
        %v645 = vmul.f32 %v581, %v581
        %v646 = vmul.f32 %v582, %v582
        %v647 = vmul.f32 %v583, %v583
        %v648 = vmul.f32 %v584, %v584
        %v649 = vmul.f32 %v585, %v585
        %v650 = vmul.f32 %v586, %v586
        %v651 = vmul.f32 %v587, %v587
        %v652 = vmul.f32 %v588, %v588
        %v653 = vmul.f32 %v589, %v589
        %v654 = vmul.f32 %v590, %v590
        %v655 = vmul.f32 %v591, %v591
        %v656 = vmul.f32 %v592, %v592
        %v657 = vmul.f32 %v593, %v593
        %v658 = vmul.f32 %v594, %v594
        %v659 = vmul.f32 %v595, %v595
        %v660 = vmul.f32 %v596, %v596
        %v661 = vmul.f32 %v597, %v597
        %v662 = vmul.f32 %v598, %v598
        %v663 = vmul.f32 %v599, %v599
        %v664 = vmul.f32 %v600, %v600
        %v665 = vmul.f32 %v601, %v601
        %v666 = vmul.f32 %v602, %v602
        %v667 = vmul.f32 %v603, %v603
        %v668 = vmul.f32 %v604, %v604
        %v669 = vmul.f32 %v605, %v605
        %v670 = vmul.f32 %v606, %v606
        %v671 = vmul.f32 %v607, %v607
        %v672 = vmul.f32 %v608, %v608
        %v673 = vmul.f32 %v609, %v609
        %v674 = vmul.f32 %v610, %v610
        %v675 = vmul.f32 %v611, %v611
        %v676 = vmul.f32 %v612, %v612
        %v677 = vld [vmem:[%s2] sm:$0xff]
        %v678 = vld [vmem:[%s2 + $0x8] sm:$0xff]
        %v679 = vld [vmem:[%s2 + $0x10] sm:$0xff]
        %v680 = vld [vmem:[%s2 + $0x18] sm:$0xff]
        %v681 = vld [vmem:[%s2 + $0x20] sm:$0xff]
        %v682 = vld [vmem:[%s2 + $0x28] sm:$0xff]
        %v683 = vld [vmem:[%s2 + $0x30] sm:$0xff]
        %v684 = vld [vmem:[%s2 + $0x38] sm:$0xff]
        %v685 = vld [vmem:[%s2 + $0x40] sm:$0xff]
        %v686 = vld [vmem:[%s2 + $0x48] sm:$0xff]
        %v687 = vld [vmem:[%s2 + $0x50] sm:$0xff]
        %v688 = vld [vmem:[%s2 + $0x58] sm:$0xff]
        %v689 = vld [vmem:[%s2 + $0x60] sm:$0xff]
        %v690 = vld [vmem:[%s2 + $0x68] sm:$0xff]
        %v691 = vld [vmem:[%s2 + $0x70] sm:$0xff]
        %v692 = vld [vmem:[%s2 + $0x78] sm:$0xff]
        %v693 = vld [vmem:[%s2 + $0x80] sm:$0xff]
        %v694 = vld [vmem:[%s2 + $0x88] sm:$0xff]
        %v695 = vld [vmem:[%s2 + $0x90] sm:$0xff]
        %v696 = vld [vmem:[%s2 + $0x98] sm:$0xff]
        %v697 = vld [vmem:[%s2 + $0xa0] sm:$0xff]
        %v698 = vld [vmem:[%s2 + $0xa8] sm:$0xff]
        %v699 = vld [vmem:[%s2 + $0xb0] sm:$0xff]
        %v700 = vld [vmem:[%s2 + $0xb8] sm:$0xff]
        %v701 = vld [vmem:[%s2 + $0xc0] sm:$0xff]
        %v702 = vld [vmem:[%s2 + $0xc8] sm:$0xff]
        %v703 = vld [vmem:[%s2 + $0xd0] sm:$0xff]
        %v704 = vld [vmem:[%s2 + $0xd8] sm:$0xff]
        %v705 = vld [vmem:[%s2 + $0xe0] sm:$0xff]
        %v706 = vld [vmem:[%s2 + $0xe8] sm:$0xff]
        %v707 = vld [vmem:[%s2 + $0xf0] sm:$0xff]
        %v708 = vld [vmem:[%s2 + $0xf8] sm:$0xff]
        %710 = vset.pattern.permute.xlu0 0
        %711 = vperm.xlu0 %710, %v677
        %v712 = vpop.permute.xlu0 %711
        %715 = vset.pattern.permute.xlu0 0
        %716 = vperm.xlu0 %715, %v678
        %v717 = vpop.permute.xlu0 %716
        %720 = vset.pattern.permute.xlu0 0
        %721 = vperm.xlu0 %720, %v679
        %v722 = vpop.permute.xlu0 %721
        %725 = vset.pattern.permute.xlu0 0
        %726 = vperm.xlu0 %725, %v680
        %v727 = vpop.permute.xlu0 %726
        %730 = vset.pattern.permute.xlu0 0
        %731 = vperm.xlu0 %730, %v681
        %v732 = vpop.permute.xlu0 %731
        %735 = vset.pattern.permute.xlu0 0
        %736 = vperm.xlu0 %735, %v682
        %v737 = vpop.permute.xlu0 %736
        %740 = vset.pattern.permute.xlu0 0
        %741 = vperm.xlu0 %740, %v683
        %v742 = vpop.permute.xlu0 %741
        %745 = vset.pattern.permute.xlu0 0
        %746 = vperm.xlu0 %745, %v684
        %v747 = vpop.permute.xlu0 %746
        %750 = vset.pattern.permute.xlu0 0
        %751 = vperm.xlu0 %750, %v685
        %v752 = vpop.permute.xlu0 %751
        %755 = vset.pattern.permute.xlu0 0
        %756 = vperm.xlu0 %755, %v686
        %v757 = vpop.permute.xlu0 %756
        %760 = vset.pattern.permute.xlu0 0
        %761 = vperm.xlu0 %760, %v687
        %v762 = vpop.permute.xlu0 %761
        %765 = vset.pattern.permute.xlu0 0
        %766 = vperm.xlu0 %765, %v688
        %v767 = vpop.permute.xlu0 %766
        %770 = vset.pattern.permute.xlu0 0
        %771 = vperm.xlu0 %770, %v689
        %v772 = vpop.permute.xlu0 %771
        %775 = vset.pattern.permute.xlu0 0
        %776 = vperm.xlu0 %775, %v690
        %v777 = vpop.permute.xlu0 %776
        %780 = vset.pattern.permute.xlu0 0
        %781 = vperm.xlu0 %780, %v691
        %v782 = vpop.permute.xlu0 %781
        %785 = vset.pattern.permute.xlu0 0
        %786 = vperm.xlu0 %785, %v692
        %v787 = vpop.permute.xlu0 %786
        %790 = vset.pattern.permute.xlu0 0
        %791 = vperm.xlu0 %790, %v693
        %v792 = vpop.permute.xlu0 %791
        %795 = vset.pattern.permute.xlu0 0
        %796 = vperm.xlu0 %795, %v694
        %v797 = vpop.permute.xlu0 %796
        %800 = vset.pattern.permute.xlu0 0
        %801 = vperm.xlu0 %800, %v695
        %v802 = vpop.permute.xlu0 %801
        %805 = vset.pattern.permute.xlu0 0
        %806 = vperm.xlu0 %805, %v696
        %v807 = vpop.permute.xlu0 %806
        %810 = vset.pattern.permute.xlu0 0
        %811 = vperm.xlu0 %810, %v697
        %v812 = vpop.permute.xlu0 %811
        %815 = vset.pattern.permute.xlu0 0
        %816 = vperm.xlu0 %815, %v698
        %v817 = vpop.permute.xlu0 %816
        %820 = vset.pattern.permute.xlu0 0
        %821 = vperm.xlu0 %820, %v699
        %v822 = vpop.permute.xlu0 %821
        %825 = vset.pattern.permute.xlu0 0
        %826 = vperm.xlu0 %825, %v700
        %v827 = vpop.permute.xlu0 %826
        %830 = vset.pattern.permute.xlu0 0
        %831 = vperm.xlu0 %830, %v701
        %v832 = vpop.permute.xlu0 %831
        %835 = vset.pattern.permute.xlu0 0
        %836 = vperm.xlu0 %835, %v702
        %v837 = vpop.permute.xlu0 %836
        %840 = vset.pattern.permute.xlu0 0
        %841 = vperm.xlu0 %840, %v703
        %v842 = vpop.permute.xlu0 %841
        %845 = vset.pattern.permute.xlu0 0
        %846 = vperm.xlu0 %845, %v704
        %v847 = vpop.permute.xlu0 %846
        %850 = vset.pattern.permute.xlu0 0
        %851 = vperm.xlu0 %850, %v705
        %v852 = vpop.permute.xlu0 %851
        %855 = vset.pattern.permute.xlu0 0
        %856 = vperm.xlu0 %855, %v706
        %v857 = vpop.permute.xlu0 %856
        %860 = vset.pattern.permute.xlu0 0
        %861 = vperm.xlu0 %860, %v707
        %v862 = vpop.permute.xlu0 %861
        %865 = vset.pattern.permute.xlu0 0
        %866 = vperm.xlu0 %865, %v708
        %v867 = vpop.permute.xlu0 %866
        %v869 = vmul.f32 %v613, %v712
        %v870 = vmul.f32 %v614, %v712
        %v871 = vmul.f32 %v615, %v717
        %v872 = vmul.f32 %v616, %v717
        %v873 = vmul.f32 %v617, %v722
        %v874 = vmul.f32 %v618, %v722
        %v875 = vmul.f32 %v619, %v727
        %v876 = vmul.f32 %v620, %v727
        %v877 = vmul.f32 %v621, %v732
        %v878 = vmul.f32 %v622, %v732
        %v879 = vmul.f32 %v623, %v737
        %v880 = vmul.f32 %v624, %v737
        %v881 = vmul.f32 %v625, %v742
        %v882 = vmul.f32 %v626, %v742
        %v883 = vmul.f32 %v627, %v747
        %v884 = vmul.f32 %v628, %v747
        %v885 = vmul.f32 %v629, %v752
        %v886 = vmul.f32 %v630, %v752
        %v887 = vmul.f32 %v631, %v757
        %v888 = vmul.f32 %v632, %v757
        %v889 = vmul.f32 %v633, %v762
        %v890 = vmul.f32 %v634, %v762
        %v891 = vmul.f32 %v635, %v767
        %v892 = vmul.f32 %v636, %v767
        %v893 = vmul.f32 %v637, %v772
        %v894 = vmul.f32 %v638, %v772
        %v895 = vmul.f32 %v639, %v777
        %v896 = vmul.f32 %v640, %v777
        %v897 = vmul.f32 %v641, %v782
        %v898 = vmul.f32 %v642, %v782
        %v899 = vmul.f32 %v643, %v787
        %v900 = vmul.f32 %v644, %v787
        %v901 = vmul.f32 %v645, %v792
        %v902 = vmul.f32 %v646, %v792
        %v903 = vmul.f32 %v647, %v797
        %v904 = vmul.f32 %v648, %v797
        %v905 = vmul.f32 %v649, %v802
        %v906 = vmul.f32 %v650, %v802
        %v907 = vmul.f32 %v651, %v807
        %v908 = vmul.f32 %v652, %v807
        %v909 = vmul.f32 %v653, %v812
        %v910 = vmul.f32 %v654, %v812
        %v911 = vmul.f32 %v655, %v817
        %v912 = vmul.f32 %v656, %v817
        %v913 = vmul.f32 %v657, %v822
        %v914 = vmul.f32 %v658, %v822
        %v915 = vmul.f32 %v659, %v827
        %v916 = vmul.f32 %v660, %v827
        %v917 = vmul.f32 %v661, %v832
        %v918 = vmul.f32 %v662, %v832
        %v919 = vmul.f32 %v663, %v837
        %v920 = vmul.f32 %v664, %v837
        %v921 = vmul.f32 %v665, %v842
        %v922 = vmul.f32 %v666, %v842
        %v923 = vmul.f32 %v667, %v847
        %v924 = vmul.f32 %v668, %v847
        %v925 = vmul.f32 %v669, %v852
        %v926 = vmul.f32 %v670, %v852
        %v927 = vmul.f32 %v671, %v857
        %v928 = vmul.f32 %v672, %v857
        %v929 = vmul.f32 %v673, %v862
        %v930 = vmul.f32 %v674, %v862
        %v931 = vmul.f32 %v675, %v867
        %v932 = vmul.f32 %v676, %v867
        %v933 = vmul.f32 %v869, 1.442695
        %v934 = vpow.pop %v933
        %v935 = vmul.f32 %v870, 1.442695
        %v936 = vpow.pop %v935
        %v937 = vmul.f32 %v871, 1.442695
        %v938 = vpow.pop %v937
        %v939 = vmul.f32 %v872, 1.442695
        %v940 = vpow.pop %v939
        %v941 = vmul.f32 %v873, 1.442695
        %v942 = vpow.pop %v941
        %v943 = vmul.f32 %v874, 1.442695
        %v944 = vpow.pop %v943
        %v945 = vmul.f32 %v875, 1.442695
        %v946 = vpow.pop %v945
        %v947 = vmul.f32 %v876, 1.442695
        %v948 = vpow.pop %v947
        %v949 = vmul.f32 %v877, 1.442695
        %v950 = vpow.pop %v949
        %v951 = vmul.f32 %v878, 1.442695
        %v952 = vpow.pop %v951
        %v953 = vmul.f32 %v879, 1.442695
        %v954 = vpow.pop %v953
        %v955 = vmul.f32 %v880, 1.442695
        %v956 = vpow.pop %v955
        %v957 = vmul.f32 %v881, 1.442695
        %v958 = vpow.pop %v957
        %v959 = vmul.f32 %v882, 1.442695
        %v960 = vpow.pop %v959
        %v961 = vmul.f32 %v883, 1.442695
        %v962 = vpow.pop %v961
        %v963 = vmul.f32 %v884, 1.442695
        %v964 = vpow.pop %v963
        %v965 = vmul.f32 %v885, 1.442695
        %v966 = vpow.pop %v965
        %v967 = vmul.f32 %v886, 1.442695
        %v968 = vpow.pop %v967
        %v969 = vmul.f32 %v887, 1.442695
        %v970 = vpow.pop %v969
        %v971 = vmul.f32 %v888, 1.442695
        %v972 = vpow.pop %v971
        %v973 = vmul.f32 %v889, 1.442695
        %v974 = vpow.pop %v973
        %v975 = vmul.f32 %v890, 1.442695
        %v976 = vpow.pop %v975
        %v977 = vmul.f32 %v891, 1.442695
        %v978 = vpow.pop %v977
        %v979 = vmul.f32 %v892, 1.442695
        %v980 = vpow.pop %v979
        %v981 = vmul.f32 %v893, 1.442695
        %v982 = vpow.pop %v981
        %v983 = vmul.f32 %v894, 1.442695
        %v984 = vpow.pop %v983
        %v985 = vmul.f32 %v895, 1.442695
        %v986 = vpow.pop %v985
        %v987 = vmul.f32 %v896, 1.442695
        %v988 = vpow.pop %v987
        %v989 = vmul.f32 %v897, 1.442695
        %v990 = vpow.pop %v989
        %v991 = vmul.f32 %v898, 1.442695
        %v992 = vpow.pop %v991
        %v993 = vmul.f32 %v899, 1.442695
        %v994 = vpow.pop %v993
        %v995 = vmul.f32 %v900, 1.442695
        %v996 = vpow.pop %v995
        %v997 = vmul.f32 %v901, 1.442695
        %v998 = vpow.pop %v997
        %v999 = vmul.f32 %v902, 1.442695
        %v1000 = vpow.pop %v999
        %v1001 = vmul.f32 %v903, 1.442695
        %v1002 = vpow.pop %v1001
        %v1003 = vmul.f32 %v904, 1.442695
        %v1004 = vpow.pop %v1003
        %v1005 = vmul.f32 %v905, 1.442695
        %v1006 = vpow.pop %v1005
        %v1007 = vmul.f32 %v906, 1.442695
        %v1008 = vpow.pop %v1007
        %v1009 = vmul.f32 %v907, 1.442695
        %v1010 = vpow.pop %v1009
        %v1011 = vmul.f32 %v908, 1.442695
        %v1012 = vpow.pop %v1011
        %v1013 = vmul.f32 %v909, 1.442695
        %v1014 = vpow.pop %v1013
        %v1015 = vmul.f32 %v910, 1.442695
        %v1016 = vpow.pop %v1015
        %v1017 = vmul.f32 %v911, 1.442695
        %v1018 = vpow.pop %v1017
        %v1019 = vmul.f32 %v912, 1.442695
        %v1020 = vpow.pop %v1019
        %v1021 = vmul.f32 %v913, 1.442695
        %v1022 = vpow.pop %v1021
        %v1023 = vmul.f32 %v914, 1.442695
        %v1024 = vpow.pop %v1023
        %v1025 = vmul.f32 %v915, 1.442695
        %v1026 = vpow.pop %v1025
        %v1027 = vmul.f32 %v916, 1.442695
        %v1028 = vpow.pop %v1027
        %v1029 = vmul.f32 %v917, 1.442695
        %v1030 = vpow.pop %v1029
        %v1031 = vmul.f32 %v918, 1.442695
        %v1032 = vpow.pop %v1031
        %v1033 = vmul.f32 %v919, 1.442695
        %v1034 = vpow.pop %v1033
        %v1035 = vmul.f32 %v920, 1.442695
        %v1036 = vpow.pop %v1035
        %v1037 = vmul.f32 %v921, 1.442695
        %v1038 = vpow.pop %v1037
        %v1039 = vmul.f32 %v922, 1.442695
        %v1040 = vpow.pop %v1039
        %v1041 = vmul.f32 %v923, 1.442695
        %v1042 = vpow.pop %v1041
        %v1043 = vmul.f32 %v924, 1.442695
        %v1044 = vpow.pop %v1043
        %v1045 = vmul.f32 %v925, 1.442695
        %v1046 = vpow.pop %v1045
        %v1047 = vmul.f32 %v926, 1.442695
        %v1048 = vpow.pop %v1047
        %v1049 = vmul.f32 %v927, 1.442695
        %v1050 = vpow.pop %v1049
        %v1051 = vmul.f32 %v928, 1.442695
        %v1052 = vpow.pop %v1051
        %v1053 = vmul.f32 %v929, 1.442695
        %v1054 = vpow.pop %v1053
        %v1055 = vmul.f32 %v930, 1.442695
        %v1056 = vpow.pop %v1055
        %v1057 = vmul.f32 %v931, 1.442695
        %v1058 = vpow.pop %v1057
        %v1059 = vmul.f32 %v932, 1.442695
        %v1060 = vpow.pop %v1059
        %v1061 = vld [vmem:[%s3] sm:$0xff]
        %v1062 = vld [vmem:[%s3 + $0x8] sm:$0xff]
        %v1063 = vld [vmem:[%s3 + $0x10] sm:$0xff]
        %v1064 = vld [vmem:[%s3 + $0x18] sm:$0xff]
        %v1065 = vld [vmem:[%s4] sm:$0xff]
        %v1066 = vld [vmem:[%s4 + $0x8] sm:$0xff]
        %1068 = vset.pattern.permute.xlu0 0
        %1069 = vperm.xlu0 %1068, %v1065
        %v1070 = vpop.permute.xlu0 %1069
        %1073 = vset.pattern.permute.xlu0 0
        %1074 = vperm.xlu0 %1073, %v1066
        %v1075 = vpop.permute.xlu0 %1074
        %1077 = vmatprep.subr.mxu0 %v936
        %1078 = vmatpush1.msra.mxu0 %v934
        %1079 = vmatprep.subr.mxu0 %v940
        %1080 = vmatpush1.msra.mxu0 %v938
        %1081 = vmatprep.subr.mxu0 %v944
        %1082 = vmatpush1.msra.mxu0 %v942
        %1083 = vmatprep.subr.mxu0 %v948
        %1084 = vmatpush1.msra.mxu0 %v946
        %1085 = vmatprep.subr.mxu0 %v952
        %1086 = vmatpush1.msra.mxu0 %v950
        %1087 = vmatprep.subr.mxu0 %v956
        %1088 = vmatpush1.msra.mxu0 %v954
        %1089 = vmatprep.subr.mxu0 %v960
        %1090 = vmatpush1.msra.mxu0 %v958
        %1091 = vmatprep.subr.mxu0 %v964
        %1092 = vmatpush1.msra.mxu0 %v962
        %1093 = vmatprep.subr.mxu0 %v968
        %1094 = vmatpush1.msra.mxu0 %v966
        %1095 = vmatprep.subr.mxu0 %v972
        %1096 = vmatpush1.msra.mxu0 %v970
        %1097 = vmatprep.subr.mxu0 %v976
        %1098 = vmatpush1.msra.mxu0 %v974
        %1099 = vmatprep.subr.mxu0 %v980
        %1100 = vmatpush1.msra.mxu0 %v978
        %1101 = vmatprep.subr.mxu0 %v984
        %1102 = vmatpush1.msra.mxu0 %v982
        %1103 = vmatprep.subr.mxu0 %v988
        %1104 = vmatpush1.msra.mxu0 %v986
        %1105 = vmatprep.subr.mxu0 %v992
        %1106 = vmatpush1.msra.mxu0 %v990
        %1107 = vmatprep.subr.mxu0 %v996
        %1108 = vmatpush1.msra.mxu0 %v994
        %1109 = vmatprep.subr.mxu0 %v1000
        %1110 = vmatpush1.msra.mxu0 %v998
        %1111 = vmatprep.subr.mxu0 %v1004
        %1112 = vmatpush1.msra.mxu0 %v1002
        %1113 = vmatprep.subr.mxu0 %v1008
        %1114 = vmatpush1.msra.mxu0 %v1006
        %1115 = vmatprep.subr.mxu0 %v1012
        %1116 = vmatpush1.msra.mxu0 %v1010
        %1117 = vmatprep.subr.mxu0 %v1016
        %1118 = vmatpush1.msra.mxu0 %v1014
        %1119 = vmatprep.subr.mxu0 %v1020
        %1120 = vmatpush1.msra.mxu0 %v1018
        %1121 = vmatprep.subr.mxu0 %v1024
        %1122 = vmatpush1.msra.mxu0 %v1022
        %1123 = vmatprep.subr.mxu0 %v1028
        %1124 = vmatpush1.msra.mxu0 %v1026
        %1125 = vmatprep.subr.mxu0 %v1032
        %1126 = vmatpush1.msra.mxu0 %v1030
        %1127 = vmatprep.subr.mxu0 %v1036
        %1128 = vmatpush1.msra.mxu0 %v1034
        %1129 = vmatprep.subr.mxu0 %v1040
        %1130 = vmatpush1.msra.mxu0 %v1038
        %1131 = vmatprep.subr.mxu0 %v1044
        %1132 = vmatpush1.msra.mxu0 %v1042
        %1133 = vmatprep.subr.mxu0 %v1048
        %1134 = vmatpush1.msra.mxu0 %v1046
        %1135 = vmatprep.subr.mxu0 %v1052
        %1136 = vmatpush1.msra.mxu0 %v1050
        %1137 = vmatprep.subr.mxu0 %v1056
        %1138 = vmatpush1.msra.mxu0 %v1054
        %1139 = vmatprep.subr.mxu0 %v1060
        %1140 = vmatpush1.msra.mxu0 %v1058
        %1141 = vmatprep.mubr.f32.mxu0 %v1062
        %1142 = vmatmul.mubr.f32.gmra.mrb[0].mxu0 %v1061
        %v1143 = vpop.f32.mrb[0].mxu0
        %v1144 = vadd.f32 %v1070, %v1143
        %v1145 = vpop.f32.mrb[0].mxu0
        %v1146 = vadd.f32 %v1070, %v1145
        %1147 = vmatprep.mubr.f32.mxu0 %v1064
        %1148 = vmatmul.mubr.f32.gmra.mrb[0].mxu0 %v1063
        %v1149 = vpop.f32.mrb[0].mxu0
        %v1150 = vadd.f32 %v1075, %v1149
        %v1151 = vpop.f32.mrb[0].mxu0
        %v1152 = vadd.f32 %v1075, %v1151
        %1153 = vdwg.mxu0
        %v1154 = vmul.f32 %v1144, 4e-05
        %v1155 = vmul.f32 %v1146, 4e-05
        %v1156 = vmul.f32 %v1154, 2.314e-06
        %v1157 = vmul.f32 %v1155, 2.314e-06
        %v1158 = vadd.f32 %v1156, -0.0003295
        %v1159 = vadd.f32 %v1157, -0.0003295
        %v1160 = vmul.f32 %v1158, %v1154
        %v1161 = vmul.f32 %v1159, %v1155
        %v1162 = vadd.f32 %v1160, -0.00399
        %v1163 = vadd.f32 %v1161, -0.00399
        %v1164 = vmul.f32 %v1162, %v1154
        %v1165 = vmul.f32 %v1163, %v1155
        %v1166 = vadd.f32 %v1164, 2.537
        %v1167 = vadd.f32 %v1165, 2.537
        %v1168 = vmul.f32 %v1166, %v1154
        %v1169 = vmul.f32 %v1167, %v1155
        %v1170 = vadd.f32 %v1168, 19.21
        %v1171 = vadd.f32 %v1169, 19.21
        %v1174 = vrot.slane %v1170, 7
        %v1175 = vrot.slane %v1171, 7
        %vm1178 = vcmask 1040384
        %v1179 = vsel %vm1178, %v1150, %v1174
        %v1180 = vsel %vm1178, %v1152, %v1175
        %vm1181 = vcmask 1045504
        %v1182 = vsel %vm1181, %v1179, 0.0
        %v1183 = vsel %vm1181, %v1180, 0.0
        %v1184 = vld [vmem:[%s5] sm:$0xff]
        %v1185 = vld [vmem:[%s5 + $0x8] sm:$0xff]
        %vm1186 = vcmask 130048
        %v1188 = vsel %vm1186, %v1184, 0
        %v1191 = vsel %vm1186, %v1185, 0
        %1193 = vmatprep.subr.mxu0 %v1146
        %1194 = vmatpush1.msra.mxu0 %v1144
        %1195 = vmatprep.subr.mxu0 %v1183
        %1196 = vmatpush1.msra.mxu0 %v1182
        %1197 = vmatprep.subr.mxu0 0.0
        %1198 = vmatpush1.msra.mxu0 0.0
        %1199 = vmatprep.subr.mxu0 0.0
        %1200 = vmatpush1.msra.mxu0 0.0
        %1201 = vmatprep.subr.mxu0 0.0
        %1202 = vmatpush1.msra.mxu0 0.0
        %1203 = vmatprep.subr.mxu0 0.0
        %1204 = vmatpush1.msra.mxu0 0.0
        %1205 = vmatprep.subr.mxu0 0.0
        %1206 = vmatpush1.msra.mxu0 0.0
        %1207 = vmatprep.subr.mxu0 0.0
        %1208 = vmatpush1.msra.mxu0 0.0
        %1209 = vmatprep.subr.mxu0 0.0
        %1210 = vmatpush1.msra.mxu0 0.0
        %1211 = vmatprep.subr.mxu0 0.0
        %1212 = vmatpush1.msra.mxu0 0.0
        %1213 = vmatprep.subr.mxu0 0.0
        %1214 = vmatpush1.msra.mxu0 0.0
        %1215 = vmatprep.subr.mxu0 0.0
        %1216 = vmatpush1.msra.mxu0 0.0
        %1217 = vmatprep.subr.mxu0 0.0
        %1218 = vmatpush1.msra.mxu0 0.0
        %1219 = vmatprep.subr.mxu0 0.0
        %1220 = vmatpush1.msra.mxu0 0.0
        %1221 = vmatprep.subr.mxu0 0.0
        %1222 = vmatpush1.msra.mxu0 0.0
        %1223 = vmatprep.subr.mxu0 0.0
        %1224 = vmatpush1.msra.mxu0 0.0
        %1225 = vmatprep.subr.mxu0 0.0
        %1226 = vmatpush1.msra.mxu0 0.0
        %1227 = vmatprep.subr.mxu0 0.0
        %1228 = vmatpush1.msra.mxu0 0.0
        %1229 = vmatprep.subr.mxu0 0.0
        %1230 = vmatpush1.msra.mxu0 0.0
        %1231 = vmatprep.subr.mxu0 0.0
        %1232 = vmatpush1.msra.mxu0 0.0
        %1233 = vmatprep.subr.mxu0 0.0
        %1234 = vmatpush1.msra.mxu0 0.0
        %1235 = vmatprep.subr.mxu0 0.0
        %1236 = vmatpush1.msra.mxu0 0.0
        %1237 = vmatprep.subr.mxu0 0.0
        %1238 = vmatpush1.msra.mxu0 0.0
        %1239 = vmatprep.subr.mxu0 0.0
        %1240 = vmatpush1.msra.mxu0 0.0
        %1241 = vmatprep.subr.mxu0 0.0
        %1242 = vmatpush1.msra.mxu0 0.0
        %1243 = vmatprep.subr.mxu0 0.0
        %1244 = vmatpush1.msra.mxu0 0.0
        %1245 = vmatprep.subr.mxu0 0.0
        %1246 = vmatpush1.msra.mxu0 0.0
        %1247 = vmatprep.subr.mxu0 0.0
        %1248 = vmatpush1.msra.mxu0 0.0
        %1249 = vmatprep.subr.mxu0 0.0
        %1250 = vmatpush1.msra.mxu0 0.0
        %1251 = vmatprep.subr.mxu0 0.0
        %1252 = vmatpush1.msra.mxu0 0.0
        %1253 = vmatprep.subr.mxu0 0.0
        %1254 = vmatpush1.msra.mxu0 0.0
        %1255 = vmatprep.subr.mxu0 0.0
        %1256 = vmatpush1.msra.mxu0 0.0
        %1257 = vmatprep.mubr.f32.mxu0 0.0
        %1258 = vmatmul.mubr.f32.gmra.mrb[0].mxu0 %v1188
        %v1259 = vpop.f32.mrb[0].mxu0
        %v1260 = vadd.f32 0.0, %v1259
        %v1261 = vpop.f32.mrb[0].mxu0
        %v1262 = vadd.f32 0.0, %v1261
        %1263 = vmatprep.mubr.f32.mxu0 0.0
        %1264 = vmatmul.mubr.f32.gmra.mrb[0].mxu0 %v1191
        %v1265 = vpop.f32.mrb[0].mxu0
        %v1266 = vadd.f32 0.0, %v1265
        %v1267 = vpop.f32.mrb[0].mxu0
        %v1268 = vadd.f32 0.0, %v1267
        %1269 = vdwg.mxu0
        %v1270 = vmul.f32 %v1144, %v1144
        %v1271 = vmul.f32 %v1146, %v1146
        %v1272 = vmul.f32 %v1182, %v1182
        %v1273 = vmul.f32 %v1183, %v1183
        %v1274 = vadd.f32 %v1270, %v1272
        %v1275 = vrot.slane %v1274, 4
        %v1276 = vadd.f32 %v1274, %v1275
        %v1277 = vrot.slane %v1276, 2
        %v1278 = vadd.f32 %v1276, %v1277
        %v1279 = vrot.slane %v1278, 1
        %v1280 = vadd.f32 %v1278, %v1279
        %v1281 = vadd.f32 %v1271, %v1273
        %v1282 = vrot.slane %v1281, 4
        %v1283 = vadd.f32 %v1281, %v1282
        %v1284 = vrot.slane %v1283, 2
        %v1285 = vadd.f32 %v1283, %v1284
        %v1286 = vrot.slane %v1285, 1
        %v1287 = vadd.f32 %v1285, %v1286
        %v1288 = vld [vmem:[%s6] sm:$0xff]
        %v1289 = vld [vmem:[%s6 + $0x8] sm:$0xff]
        %1291 = vset.pattern.permute.xlu0 0
        %1292 = vperm.xlu0 %1291, %v1288
        %v1293 = vpop.permute.xlu0 %1292
        %1296 = vset.pattern.permute.xlu0 0
        %1297 = vperm.xlu0 %1296, %v1289
        %v1298 = vpop.permute.xlu0 %1297
        %v1300 = vadd.f32 %v1293, %v1280
        %v1301 = vadd.f32 %v1293, %v1287
        %v1302 = vadd.f32 %v1298, %v1280
        %v1303 = vadd.f32 %v1298, %v1287
        %v1304 = vmul.f32 %v1260, 2.0
        %v1305 = vmul.f32 %v1262, 2.0
        %v1306 = vmul.f32 %v1266, 2.0
        %v1307 = vmul.f32 %v1268, 2.0
        %v1308 = vsub.f32 %v1300, %v1304
        %v1309 = vsub.f32 %v1301, %v1305
        %v1310 = vsub.f32 %v1302, %v1306
        %v1311 = vsub.f32 %v1303, %v1307
        %v1312 = vmax.f32 %v1308, 0.0
        %v1313 = vmax.f32 %v1309, 0.0
        %v1314 = vmax.f32 %v1310, 0.0
        %v1315 = vmax.f32 %v1311, 0.0
        %s1316 = sld [smem:[#allocation2]]
        %s1317 = sld [smem:[#allocation2 + $0x1]]
        %v1318 = vstv %s1316
        %v1319 = vmul.f32 %v1312, %v1318
        %v1320 = vmul.f32 %v1313, %v1318
        %v1321 = vmul.f32 %v1314, %v1318
        %v1322 = vmul.f32 %v1315, %v1318
        %v1323 = vmul.f32 %v1319, 1.442695
        %v1324 = vpow.pop %v1323
        %v1325 = vmul.f32 %v1320, 1.442695
        %v1326 = vpow.pop %v1325
        %v1327 = vmul.f32 %v1321, 1.442695
        %v1328 = vpow.pop %v1327
        %v1329 = vmul.f32 %v1322, 1.442695
        %v1330 = vpow.pop %v1329
        %v1331 = vld [vmem:[%s7] sm:$0xff]
        %v1332 = vld [vmem:[%s7 + $0x8] sm:$0xff]
        %1334 = vset.pattern.permute.xlu0 0
        %1335 = vperm.xlu0 %1334, %v1331
        %v1336 = vpop.permute.xlu0 %1335
        %1339 = vset.pattern.permute.xlu0 0
        %1340 = vperm.xlu0 %1339, %v1332
        %v1341 = vpop.permute.xlu0 %1340
        %v1343 = vmul.f32 %v1336, %v1324
        %v1344 = vmul.f32 %v1336, %v1326
        %v1345 = vmul.f32 %v1341, %v1328
        %v1346 = vmul.f32 %v1341, %v1330
        %v1347 = vadd.f32 %v1343, %v1345
        %v1348 = vrot.slane %v1347, 4
        %v1349 = vadd.f32 %v1347, %v1348
        %v1350 = vrot.slane %v1349, 2
        %v1351 = vadd.f32 %v1349, %v1350
        %v1352 = vrot.slane %v1351, 1
        %v1353 = vadd.f32 %v1351, %v1352
        %v1354 = vadd.f32 %v1344, %v1346
        %v1355 = vrot.slane %v1354, 4
        %v1356 = vadd.f32 %v1354, %v1355
        %v1357 = vrot.slane %v1356, 2
        %v1358 = vadd.f32 %v1356, %v1357
        %v1359 = vrot.slane %v1358, 1
        %v1360 = vadd.f32 %v1358, %v1359
        %v1361 = vstv %s1317
        %v1362 = vadd.f32 %v1353, %v1361
        %v1363 = vadd.f32 %v1360, %v1361
        %v1366 = vcombine.low %v1362, %v1363
        %v1368 = vunpack.c.l.s4 1966171168
        %v1369 = vunpack.c.0.s8 %v1368
        %v1370 = vlaneseq
        %v1371 = vshrl.u32 %v1370, 7
        %v1372 = vsub.s32 %v1369, %v1371
        %v1373 = vrot.slane %v1366, %v1372
        %v1375 = vunpack.c.l.s4 1966171168
        %v1376 = vunpack.c.0.s8 %v1375
        %v1377 = vlaneseq
        %v1378 = vshrl.u32 %v1377, 7
        %v1379 = vsub.s32 %v1376, %v1378
        %v1380 = vrot.slane %v1373, %v1379
        %v1382 = vlaneseq
        %vm1383 = vcmp.ge.s32.totalorder %v1382, 0
        %vm1384 = vcmp.lt.s32.totalorder %v1382, 256
        %vm1385 = vmand %vm1383, %vm1384
        %1386 = vst.msk [vmem:[%s338] sm:$0x3] %vm1385, %v1380
        %s1387 = sand.u32 %s226, 1
        %s1388 = scalar_lea.sflag [#allocation3], %s1387
        %s1389 = sand.u32 %s226, 1
        %s1390 = smul.addr %s1389, 2
        %s1391 = scalar_lea.vmem [#allocation5], %s1390
        // Predicated region
        $region61: #{tpu_custom_call.1} parent=55 // pred_check
          %p1392 = pneg %p236
        $region62: #{tpu_custom_call.1} parent=55 // pred_check_branch
          %1394 = sbr.rel (%p1392) target = $region64
        $region63: #{tpu_custom_call.1} parent=55 // pred_region
          %s1395 = smul.u32 2, %s24
          %s1397 = ssub.s32 32, 32
          %1398 = vsyncadd %s1388, %s1397
          %s1399 = smul.addr %s1395, 16
          %s1400 = scalar_lea.hbm %s9, %s1399
          %s1402 = sshll.u32 %s1391, 4
          %s1403 = int_to_ptr.vmem [resolvable:$true] %s1402
          %1405 = dma.vmem_to_hbm [thread:$0]  %s1403, 32, %s1400, %s1388
        $region64: #{tpu_custom_call.1} parent=55 // pred_fallthru
          _
      $region56: #{tpu_custom_call.1} parent=5 // pred_fallthru
        _
      %p1406 = scmp.le.s32.totalorder 2, %s19
      // Predicated region
      $region65: #{tpu_custom_call.1} parent=5 // pred_check
        %p1407 = pneg %p1406
      $region66: #{tpu_custom_call.1} parent=5 // pred_check_branch
        %1409 = sbr.rel (%p1407) target = $region68
      $region67: #{tpu_custom_call.1} parent=5 // pred_region
        %s1410 = ssub.s32 %s19, 2
        // Predicated region
        $region69: #{tpu_custom_call.1} parent=67 // pred_check
          %p1411 = pneg %p242
        $region70: #{tpu_custom_call.1} parent=67 // pred_check_branch
          %1413 = sbr.rel (%p1411) target = $region72
        $region71: #{tpu_custom_call.1} parent=67 // pred_region
          %s1414 = sand.u32 %s227, 1
          %s1415 = scalar_lea.sflag [#allocation3], %s1414
          %s1416 = sand.u32 %s227, 1
          %s1417 = smul.addr %s1416, 2
          %s1418 = scalar_lea.vmem [#allocation5], %s1417
          %1419 = dma.done %s1415, 32
        $region72: #{tpu_custom_call.1} parent=67 // pred_fallthru
          _
      $region68: #{tpu_custom_call.1} parent=5 // pred_fallthru
        _
    $region6: #{tpu_custom_call.1} parent=1 // loop_footer
      %s23 = sadd.s32 1, %s19
    $region7: #{tpu_custom_call.1} parent=1 // loop_footer_branch
      %18 = sbr.rel target = $region3
    $region8: #{tpu_custom_call.1} parent=1 // loop_exit
      _
    %1420 = vsyncpa [#allocation3], 1
    %s1421 = scalar_lea.sflag [#allocation3], 1
    %1422 = vsyncpa %s1421, 1
    %1423 = vsyncpa [#allocation4], 1
    %s1424 = scalar_lea.sflag [#allocation4], 1
    %1425 = vsyncpa %s1424, 1

</llo_original>
